<compile_context>
chip_gen: v7x
topology: tpu7x:2x2x1
jax: 0.10.0
libtpu: 0.0.40
codegen_flags: <defaults>
</compile_context>

<pallas_src>
import jax
import jax.numpy as jnp
from jax import lax
from jax.experimental import pallas as pl
from jax.experimental.pallas import tpu as pltpu


def _label_smoothing_kernel(*, smoothing, reduction, n_cls, n_valid, tile_n,
                            needs_mask):
    """Kernel factory. Grid: 1-D over batch tiles (reduction axis)."""

    def kernel(preds_ref, tgt_ref, out_ref, acc_loss_ref, acc_nll_ref):
        i = pl.program_id(0)

        @pl.when(i == 0)
        def _init():
            acc_loss_ref[...] = jnp.zeros_like(acc_loss_ref)
            acc_nll_ref[...] = jnp.zeros_like(acc_nll_ref)

        # Cast the (possibly narrow-dtype) tile to f32 in-kernel.
        x = preds_ref[...].astype(jnp.float32)                    # (T, C)

        # log-softmax statistics without materializing log_p.
        m = jnp.max(x, axis=-1, keepdims=True)                    # (T, 1)
        s = jnp.sum(jnp.exp(x - m), axis=-1, keepdims=True)       # (T, 1)
        log_z = m + jnp.log(s)                                    # (T, 1)
        row_sum = jnp.sum(x, axis=-1, keepdims=True)              # (T, 1)

        # x at the target column via iota compare (no gather op).
        cls_ids = lax.broadcasted_iota(jnp.int32, x.shape, 1)     # (T, C)
        tgt = tgt_ref[...]                                        # (T, 1)
        x_t = jnp.sum(jnp.where(cls_ids == tgt, x, 0.0),
                      axis=-1, keepdims=True)                     # (T, 1)

        sum_neg = float(n_cls) * log_z - row_sum                  # (T, 1)
        nll = log_z - x_t                                         # (T, 1)

        if needs_mask:
            row_ids = (lax.broadcasted_iota(jnp.int32, (tile_n, 1), 0)
                       + i * tile_n)
            valid = (row_ids < n_valid).astype(jnp.float32)
            sum_neg = sum_neg * valid
            nll = nll * valid

        acc_loss_ref[...] += jnp.sum(sum_neg, axis=0, keepdims=True)
        acc_nll_ref[...] += jnp.sum(nll, axis=0, keepdims=True)

        @pl.when(i == pl.num_programs(0) - 1)
        def _finalize():
            scale = (1.0 / float(n_valid)) if reduction == 'mean' else 1.0
            loss = acc_loss_ref[...] * scale                      # (1, 1)
            nll_red = acc_nll_ref[...] * scale                    # (1, 1)
            out_ref[...] = (smoothing * (loss / float(n_cls))
                            + (1.0 - smoothing) * nll_red).astype(out_ref.dtype)

    return kernel


def _pick_tile_n(n_rows, n_cls, itemsize):
    # Conservative per-slab budget so the double-buffered logits tile (plus
    # the in-kernel f32 copy) fits the tightest target (v7x: 32 MiB scoped /
    # 64 MiB physical VMEM) while staying big enough to amortize per-step
    # grid overhead on v5e/v6e.
    budget_bytes = 8 * 1024 * 1024
    rows = budget_bytes // max(1, 2 * n_cls * max(int(itemsize), 4))
    rows = int(min(rows, 1024, n_rows))
    if rows >= n_rows:
        return n_rows                       # single full block, no padding
    return max(8, (rows // 8) * 8)          # sublane-aligned tile


def label_smoothing_loss(preds, target, smoothing=0.1, reduction='mean',
                         tile_n=None):
    """preds: (N, C) float logits (f32/bf16); target: (N,) int class indices."""
    assert 0.0 <= smoothing < 1.0
    if reduction not in ('mean', 'sum'):
        # TODO(synk): reduction='none' (per-row losses) and the per-class
        # `weight` argument of the PyTorch module are not implemented here.
        raise NotImplementedError("only reduction in ('mean', 'sum') supported")

    n_rows, n_cls = preds.shape
    if tile_n is None:
        tile_n = _pick_tile_n(n_rows, n_cls, preds.dtype.itemsize)

    n_pad = pl.cdiv(n_rows, tile_n) * tile_n
    needs_mask = (n_pad != n_rows)
    tgt2d = target.astype(jnp.int32).reshape(n_rows, 1)
    if needs_mask:
        preds = jnp.pad(preds, ((0, n_pad - n_rows), (0, 0)))
        tgt2d = jnp.pad(tgt2d, ((0, n_pad - n_rows), (0, 0)))

    grid = (n_pad // tile_n,)
    kernel = _label_smoothing_kernel(
        smoothing=float(smoothing), reduction=reduction, n_cls=n_cls,
        n_valid=n_rows, tile_n=tile_n, needs_mask=needs_mask)

    bytes_accessed = int(n_pad * n_cls * preds.dtype.itemsize + n_pad * 4 + 4)
    cost = pl.CostEstimate(flops=6 * n_pad * n_cls,
                           transcendentals=n_pad * n_cls,
                           bytes_accessed=bytes_accessed)

    out = pl.pallas_call(
        kernel,
        out_shape=jax.ShapeDtypeStruct((1, 1), jnp.float32),
        grid_spec=pltpu.PrefetchScalarGridSpec(
            num_scalar_prefetch=0,
            grid=grid,
            in_specs=[
                pl.BlockSpec((tile_n, n_cls), lambda i: (i, 0)),   # logits tile
                pl.BlockSpec((tile_n, 1), lambda i: (i, 0)),       # targets tile
            ],
            out_specs=pl.BlockSpec((1, 1), lambda i: (0, 0)),      # resident acc
            scratch_shapes=[pltpu.VMEM((1, 1), jnp.float32),
                            pltpu.VMEM((1, 1), jnp.float32)],
        ),
        compiler_params=pltpu.CompilerParams(
            dimension_semantics=("arbitrary",),
            vmem_limit_bytes=32 * 1024 * 1024),
        cost_estimate=cost,
    )(preds, tgt2d)
    return out[0, 0]


def _reference(preds, target, smoothing=0.1, reduction='mean'):
    log_p = jax.nn.log_softmax(preds.astype(jnp.float32), axis=-1)
    n = preds.shape[-1]
    per_row_loss = -jnp.sum(log_p, axis=-1)
    per_row_nll = -jnp.take_along_axis(
        log_p, target.astype(jnp.int32)[:, None], axis=-1)[:, 0]
    red = jnp.mean if reduction == 'mean' else jnp.sum
    return smoothing * (red(per_row_loss) / n) + (1.0 - smoothing) * red(per_row_nll)


if __name__ == "__main__":
    key = jax.random.PRNGKey(0)
    k1, k2, k3, k4 = jax.random.split(key, 4)

    # Case 1: f32 logits, 'mean' reduction, auto tile (single full block).
    N1, C1 = 16, 32
    preds1 = jax.random.normal(k1, (N1, C1), dtype=jnp.float32)
    tgt1 = jax.random.randint(k2, (N1,), 0, C1, dtype=jnp.int32)
    out1 = jax.block_until_ready(label_smoothing_loss(preds1, tgt1, 0.1, 'mean'))
    ref1 = _reference(preds1, tgt1, 0.1, 'mean')
    assert jnp.allclose(out1, ref1, atol=1e-5, rtol=1e-5), (out1, ref1)

    # Case 2: bf16 logits, 'sum' reduction, explicit small tile -> multi-step
    # grid with row padding/masking (exercises accumulate + finalize path).
    N2, C2 = 20, 48
    preds2 = jax.random.normal(k3, (N2, C2), dtype=jnp.float32).astype(jnp.bfloat16)
    tgt2 = jax.random.randint(k4, (N2,), 0, C2, dtype=jnp.int32)
    out2 = jax.block_until_ready(
        label_smoothing_loss(preds2, tgt2, 0.1, 'sum', tile_n=8))
    ref2 = _reference(preds2, tgt2, 0.1, 'sum')
    assert jnp.allclose(out2, ref2, atol=1e-3, rtol=1e-4), (out2, ref2)

    print("KERNEL_OK")
</pallas_src>

<mosaic_0001>
module attributes {stable_mosaic.version = 11 : i64} {
  func.func @kernel(%arg0: i32, %arg1: memref<16x32xf32, #tpu.memory_space<vmem>>, %arg2: memref<16x1xi32, #tpu.memory_space<vmem>>, %arg3: memref<1x1xf32, #tpu.memory_space<vmem>>, %arg4: memref<1x1xf32, #tpu.memory_space<vmem>>, %arg5: memref<1x1xf32, #tpu.memory_space<vmem>>) attributes {dimension_semantics = [#tpu.dimension_semantics<arbitrary>], iteration_bounds = array<i64: 1>, scalar_prefetch = 0 : i64, scratch_operands = 2 : i64, tpu.core_type = #tpu.core_type<tc>, window_params = [{transform_indices = @transform_0, window_bounds = array<i64: 16, 32>}, {transform_indices = @transform_1, window_bounds = array<i64: 16, 1>}, {pipeline_mode = #tpu.pipeline_mode<synchronous>, transform_indices = @transform_2, window_bounds = array<i64: 1, 1>}]} {
    %c0_i32 = arith.constant 0 : i32
    %0 = arith.cmpi eq, %arg0, %c0_i32 : i32
    %1 = arith.extui %0 : i1 to i32
    %c0_i32_0 = arith.constant 0 : i32
    %2 = arith.cmpi ne, %1, %c0_i32_0 : i32
    scf.if %2 {
      %cst_21 = arith.constant 0.000000e+00 : f32
      %40 = vector.broadcast %cst_21 : f32 to vector<1x1xf32>
      %c0_22 = arith.constant 0 : index
      %c0_23 = arith.constant 0 : index
      %41 = vector.load %arg4[%c0_22, %c0_23] : memref<1x1xf32, #tpu.memory_space<vmem>>, vector<1x1xf32>
      tpu.vector_store %arg4[%c0_22, %c0_23], %40 {strides = array<i32>} : memref<1x1xf32, #tpu.memory_space<vmem>>, vector<1x1xf32>,
      %cst_24 = arith.constant 0.000000e+00 : f32
      %42 = vector.broadcast %cst_24 : f32 to vector<1x1xf32>
      %c0_25 = arith.constant 0 : index
      %c0_26 = arith.constant 0 : index
      %43 = vector.load %arg5[%c0_25, %c0_26] : memref<1x1xf32, #tpu.memory_space<vmem>>, vector<1x1xf32>
      tpu.vector_store %arg5[%c0_25, %c0_26], %42 {strides = array<i32>} : memref<1x1xf32, #tpu.memory_space<vmem>>, vector<1x1xf32>,
    } else {
    }
    %c0 = arith.constant 0 : index
    %c0_1 = arith.constant 0 : index
    %3 = vector.load %arg1[%c0, %c0_1] : memref<16x32xf32, #tpu.memory_space<vmem>>, vector<16x32xf32>
    %cst = arith.constant dense<0xFF800000> : vector<16xf32>
    %4 = vector.multi_reduction <maximumf>, %3, %cst [1] : vector<16x32xf32> to vector<16xf32>
    %5 = vector.shape_cast %4 : vector<16xf32> to vector<16x1xf32>
    %6 = vector.broadcast %5 : vector<16x1xf32> to vector<16x32xf32>
    %7 = arith.subf %3, %6 : vector<16x32xf32>
    %8 = math.exp %7 : vector<16x32xf32>
    %cst_2 = arith.constant dense<0.000000e+00> : vector<16xf32>
    %9 = vector.multi_reduction <add>, %8, %cst_2 [1] : vector<16x32xf32> to vector<16xf32>
    %10 = vector.shape_cast %9 : vector<16xf32> to vector<16x1xf32>
    %11 = math.log %10 : vector<16x1xf32>
    %12 = arith.addf %5, %11 : vector<16x1xf32>
    %cst_3 = arith.constant dense<0.000000e+00> : vector<16xf32>
    %13 = vector.multi_reduction <add>, %3, %cst_3 [1] : vector<16x32xf32> to vector<16xf32>
    %14 = vector.shape_cast %13 : vector<16xf32> to vector<16x1xf32>
    %15 = tpu.iota {dimensions = array<i32: 1>} : vector<16x32xi32>
    %c0_4 = arith.constant 0 : index
    %c0_5 = arith.constant 0 : index
    %16 = vector.load %arg2[%c0_4, %c0_5] : memref<16x1xi32, #tpu.memory_space<vmem>>, vector<16x1xi32>
    %17 = vector.broadcast %16 : vector<16x1xi32> to vector<16x32xi32>
    %18 = arith.cmpi eq, %15, %17 : vector<16x32xi32>
    %cst_6 = arith.constant 0.000000e+00 : f32
    %19 = vector.broadcast %cst_6 : f32 to vector<16x32xf32>
    %20 = arith.select %18, %3, %19 : vector<16x32xi1>, vector<16x32xf32>
    %cst_7 = arith.constant dense<0.000000e+00> : vector<16xf32>
    %21 = vector.multi_reduction <add>, %20, %cst_7 [1] : vector<16x32xf32> to vector<16xf32>
    %22 = vector.shape_cast %21 : vector<16xf32> to vector<16x1xf32>
    %cst_8 = arith.constant 3.200000e+01 : f32
    %23 = vector.broadcast %cst_8 : f32 to vector<16x1xf32>
    %24 = arith.mulf %23, %12 : vector<16x1xf32>
    %25 = arith.subf %24, %14 : vector<16x1xf32>
    %26 = arith.subf %12, %22 : vector<16x1xf32>
    %c0_9 = arith.constant 0 : index
    %c0_10 = arith.constant 0 : index
    %27 = vector.load %arg4[%c0_9, %c0_10] : memref<1x1xf32, #tpu.memory_space<vmem>>, vector<1x1xf32>
    %cst_11 = arith.constant dense<0.000000e+00> : vector<1xf32>
    %28 = vector.multi_reduction <add>, %25, %cst_11 [0] : vector<16x1xf32> to vector<1xf32>
    %29 = vector.shape_cast %28 : vector<1xf32> to vector<1x1xf32>
    %30 = arith.addf %27, %29 : vector<1x1xf32>
    %c0_12 = arith.constant 0 : index
    %c0_13 = arith.constant 0 : index
    %31 = vector.load %arg4[%c0_12, %c0_13] : memref<1x1xf32, #tpu.memory_space<vmem>>, vector<1x1xf32>
    tpu.vector_store %arg4[%c0_12, %c0_13], %30 {strides = array<i32>} : memref<1x1xf32, #tpu.memory_space<vmem>>, vector<1x1xf32>,
    %c0_14 = arith.constant 0 : index
    %c0_15 = arith.constant 0 : index
    %32 = vector.load %arg5[%c0_14, %c0_15] : memref<1x1xf32, #tpu.memory_space<vmem>>, vector<1x1xf32>
    %cst_16 = arith.constant dense<0.000000e+00> : vector<1xf32>
    %33 = vector.multi_reduction <add>, %26, %cst_16 [0] : vector<16x1xf32> to vector<1xf32>
    %34 = vector.shape_cast %33 : vector<1xf32> to vector<1x1xf32>
    %35 = arith.addf %32, %34 : vector<1x1xf32>
    %c0_17 = arith.constant 0 : index
    %c0_18 = arith.constant 0 : index
    %36 = vector.load %arg5[%c0_17, %c0_18] : memref<1x1xf32, #tpu.memory_space<vmem>>, vector<1x1xf32>
    tpu.vector_store %arg5[%c0_17, %c0_18], %35 {strides = array<i32>} : memref<1x1xf32, #tpu.memory_space<vmem>>, vector<1x1xf32>,
    %c0_i32_19 = arith.constant 0 : i32
    %37 = arith.cmpi eq, %arg0, %c0_i32_19 : i32
    %38 = arith.extui %37 : i1 to i32
    %c0_i32_20 = arith.constant 0 : i32
    %39 = arith.cmpi ne, %38, %c0_i32_20 : i32
    scf.if %39 {
      %c0_21 = arith.constant 0 : index
      %c0_22 = arith.constant 0 : index
      %40 = vector.load %arg4[%c0_21, %c0_22] : memref<1x1xf32, #tpu.memory_space<vmem>>, vector<1x1xf32>
      %cst_23 = arith.constant 6.250000e-02 : f32
      %41 = vector.broadcast %cst_23 : f32 to vector<1x1xf32>
      %42 = arith.mulf %40, %41 : vector<1x1xf32>
      %c0_24 = arith.constant 0 : index
      %c0_25 = arith.constant 0 : index
      %43 = vector.load %arg5[%c0_24, %c0_25] : memref<1x1xf32, #tpu.memory_space<vmem>>, vector<1x1xf32>
      %cst_26 = arith.constant 6.250000e-02 : f32
      %44 = vector.broadcast %cst_26 : f32 to vector<1x1xf32>
      %45 = arith.mulf %43, %44 : vector<1x1xf32>
      %cst_27 = arith.constant 3.200000e+01 : f32
      %46 = vector.broadcast %cst_27 : f32 to vector<1x1xf32>
      %47 = arith.divf %42, %46 : vector<1x1xf32>
      %cst_28 = arith.constant 1.000000e-01 : f32
      %48 = vector.broadcast %cst_28 : f32 to vector<1x1xf32>
      %49 = arith.mulf %48, %47 : vector<1x1xf32>
      %cst_29 = arith.constant 0.899999976 : f32
      %50 = vector.broadcast %cst_29 : f32 to vector<1x1xf32>
      %51 = arith.mulf %50, %45 : vector<1x1xf32>
      %52 = arith.addf %49, %51 : vector<1x1xf32>
      %c0_30 = arith.constant 0 : index
      %c0_31 = arith.constant 0 : index
      %53 = vector.load %arg3[%c0_30, %c0_31] : memref<1x1xf32, #tpu.memory_space<vmem>>, vector<1x1xf32>
      tpu.vector_store %arg3[%c0_30, %c0_31], %52 {strides = array<i32>} : memref<1x1xf32, #tpu.memory_space<vmem>>, vector<1x1xf32>,
    } else {
    }
    return
  }
  func.func @transform_0(%arg0: i32) -> (i32, i32) {
    %c0_i32 = arith.constant 0 : i32
    %c0_i32_0 = arith.constant 0 : i32
    return %arg0, %c0_i32 : i32, i32
  }
  func.func @transform_1(%arg0: i32) -> (i32, i32) {
    %c0_i32 = arith.constant 0 : i32
    %c0_i32_0 = arith.constant 0 : i32
    return %arg0, %c0_i32 : i32, i32
  }
  func.func @transform_2(%arg0: i32) -> (i32, i32) {
    %c0_i32 = arith.constant 0 : i32
    %c0_i32_0 = arith.constant 0 : i32
    %c0_i32_1 = arith.constant 0 : i32
    return %c0_i32, %c0_i32_0 : i32, i32
  }
}

</mosaic_0001>

<llo_original>
// kernel: tpu_custom_call.1
$region0: #{tpu_custom_call.1}
  #allocation0 [shape = 'u32[]', space=smem, size = 0x4, offset = 0x4, fixed_abs, tag = 'smem constant byte address 0x4 - core index']
  #allocation1 [shape = 'u32[144,128]{1,0:T(1,128)}', space=vmem, size = 0x12000, scoped, tag = 'internal scratch']
  #allocation2 [shape = 'f32[1,1]{1,0:T(1,128)}', space=vmem, size = 0x200, scoped, tag = 'scratch operand']
  #allocation3 [shape = 'f32[1,1]{1,0:T(1,128)}', space=vmem, size = 0x200, scoped, tag = 'scratch operand']
  %s0 = inlined_call_operand.vmem [shape: f32[16,32], index: 0, kind: input, shape index: {}]
  %s1 = inlined_call_operand.vmem [shape: s32[16,1], index: 1, kind: input, shape index: {}]
  %s2 = inlined_call_operand.hbm [shape: f32[1,1], index: 2, kind: output, shape index: {}]
  %s3 = sld [smem:[#allocation0]]
  $region26: #{tpu_custom_call.1} parent=0
    _
  %s5 = ssub.s32 1, %s3
  %s6 = scalar_select 0, %s5, %s3
  $region1: #{tpu_custom_call.1} parent=0
    #allocation4 [shape = 'u8[512]{0}', space=vmem, size = 0x400, scoped, tag = 'output window, operand 0, single buffered']
    #allocation5 [shape = 's32[1]{0}', space=sflag, size = 0x4, scoped, tag = 'scoped memory for tpu_custom_call.1']
    %7 = vsyncpa [#allocation5], 0
    // Predicated region
    $region2: #{tpu_custom_call.1} parent=1 // pred_check
      _
    $region3: #{tpu_custom_call.1} parent=1 // pred_check_branch
      %9 = sbr.rel (0) target = $region5
    $region4: #{tpu_custom_call.1} parent=1 // pred_region
      _
    $region5: #{tpu_custom_call.1} parent=1 // pred_fallthru
      _
    // Predicated region
    $region6: #{tpu_custom_call.1} parent=1 // pred_check
      _
    $region7: #{tpu_custom_call.1} parent=1 // pred_check_branch
      %11 = sbr.rel (0) target = $region9
    $region8: #{tpu_custom_call.1} parent=1 // pred_region
      _
    $region9: #{tpu_custom_call.1} parent=1 // pred_fallthru
      _
    %p12 = scmp.eq.s32.totalorder 0, 0
    // Predicated region
    $region10: #{tpu_custom_call.1} parent=1 // pred_check
      %p13 = pneg %p12
    $region11: #{tpu_custom_call.1} parent=1 // pred_check_branch
      %15 = sbr.rel (%p13) target = $region13
    $region12: #{tpu_custom_call.1} parent=1 // pred_region
      %vm16 = vcmask 0
      %17 = vst.msk [vmem:[#allocation2] sm:$0x1] %vm16, 0.0
      %18 = vst.msk [vmem:[#allocation3] sm:$0x1] %vm16, 0.0
    $region13: #{tpu_custom_call.1} parent=1 // pred_fallthru
      _
    %v19 = vld [vmem:[%s0] sm:$0xff]
    %v20 = vld [vmem:[%s0 + $0x8] sm:$0xff]
    %vm21 = vcmask 261120
    %v22 = vsel %vm21, %v19, -inf
    %23 = vmax.xlane.f32.xlu0 %v22
    %v24 = vpop.xlane.xlu0 %23
    %v25 = vsel %vm21, %v20, -inf
    %26 = vmax.xlane.f32.xlu0 %v25
    %v27 = vpop.xlane.xlu0 %26
    %v28 = vsub.f32 %v19, %v24
    %v29 = vsub.f32 %v20, %v27
    %v30 = vmul.f32 %v28, 1.442695
    %v31 = vpow.pop %v30
    %v32 = vmul.f32 %v29, 1.442695
    %v33 = vpow.pop %v32
    %v34 = vsel %vm21, %v31, 0.0
    %35 = vadd.xlane.f32.xlu0 %v34
    %v36 = vpop.xlane.xlu0 %35
    %v37 = vsel %vm21, %v33, 0.0
    %38 = vadd.xlane.f32.xlu0 %v37
    %v39 = vpop.xlane.xlu0 %38
    %v40 = vlog2.pop %v36
    %v41 = vmul.f32 %v40, 0.6931472
    %v42 = vlog2.pop %v39
    %v43 = vmul.f32 %v42, 0.6931472
    %v44 = vadd.f32 %v24, %v41
    %v45 = vadd.f32 %v27, %v43
    %v46 = vsel %vm21, %v19, 0.0
    %47 = vadd.xlane.f32.xlu0 %v46
    %v48 = vpop.xlane.xlu0 %47
    %v49 = vsel %vm21, %v20, 0.0
    %50 = vadd.xlane.f32.xlu0 %v49
    %v51 = vpop.xlane.xlu0 %50
    %v52 = vlaneseq
    %v53 = vand.u32 %v52, 127
    %v54 = vld [vmem:[%s1] sm:$0xff]
    %v55 = vld [vmem:[%s1 + $0x8] sm:$0xff]
    %56 = vset.pattern.permute.xlu0 0
    %57 = vperm.xlu0 %56, %v54
    %v58 = vpop.permute.xlu0 %57
    %59 = vset.pattern.permute.xlu0 0
    %60 = vperm.xlu0 %59, %v55
    %v61 = vpop.permute.xlu0 %60
    %vm62 = vcmp.eq.s32.totalorder %v53, %v58
    %vm63 = vcmp.eq.s32.totalorder %v53, %v61
    %v64 = vsel %vm62, %v19, 0.0
    %v65 = vsel %vm63, %v20, 0.0
    %v66 = vsel %vm21, %v64, 0.0
    %67 = vadd.xlane.f32.xlu0 %v66
    %v68 = vpop.xlane.xlu0 %67
    %v69 = vsel %vm21, %v65, 0.0
    %70 = vadd.xlane.f32.xlu0 %v69
    %v71 = vpop.xlane.xlu0 %70
    %v72 = vmul.f32 %v44, 32.0
    %v73 = vmul.f32 %v45, 32.0
    %v74 = vsub.f32 %v72, %v48
    %v75 = vsub.f32 %v73, %v51
    %v76 = vsub.f32 %v44, %v68
    %v77 = vsub.f32 %v45, %v71
    %v78 = vld [vmem:[#allocation2] sm:$0x1]
    %v79 = vadd.f32 %v74, %v75
    %v80 = vrot.slane %v79, 4
    %v81 = vadd.f32 %v79, %v80
    %v82 = vrot.slane %v81, 2
    %v83 = vadd.f32 %v81, %v82
    %v84 = vrot.slane %v83, 1
    %v85 = vadd.f32 %v83, %v84
    %v86 = vadd.f32 %v78, %v85
    %vm87 = vcmask 0
    %88 = vst.msk [vmem:[#allocation2] sm:$0x1] %vm87, %v86
    %v89 = vld [vmem:[#allocation3] sm:$0x1]
    %v90 = vadd.f32 %v76, %v77
    %v91 = vrot.slane %v90, 4
    %v92 = vadd.f32 %v90, %v91
    %v93 = vrot.slane %v92, 2
    %v94 = vadd.f32 %v92, %v93
    %v95 = vrot.slane %v94, 1
    %v96 = vadd.f32 %v94, %v95
    %v97 = vadd.f32 %v89, %v96
    %98 = vst.msk [vmem:[#allocation3] sm:$0x1] %vm87, %v97
    // Predicated region
    $region14: #{tpu_custom_call.1} parent=1 // pred_check
      %p99 = pneg %p12
    $region15: #{tpu_custom_call.1} parent=1 // pred_check_branch
      %101 = sbr.rel (%p99) target = $region17
    $region16: #{tpu_custom_call.1} parent=1 // pred_region
      %v102 = vld [vmem:[#allocation2] sm:$0x1]
      %v103 = vmul.f32 %v102, 0.0625
      %v104 = vld [vmem:[#allocation3] sm:$0x1]
      %v105 = vmul.f32 %v104, 0.0625
      %v106 = vrcp.pop 32.0
      %v107 = vmul.f32 %v103, %v106
      %v108 = vmul.f32 %v107, 0.1
      %v109 = vmul.f32 %v105, 0.9
      %v110 = vadd.f32 %v108, %v109
      %111 = vst.msk [vmem:[#allocation4] sm:$0x1] %vm87, %v110
    $region17: #{tpu_custom_call.1} parent=1 // pred_fallthru
      _
    // Predicated region
    $region18: #{tpu_custom_call.1} parent=1 // pred_check
      _
    $region19: #{tpu_custom_call.1} parent=1 // pred_check_branch
      %113 = sbr.rel (0) target = $region21
    $region20: #{tpu_custom_call.1} parent=1 // pred_region
      %s115 = ssub.s32 16, 16
      %116 = vsyncadd [#allocation5], %s115
      %s118 = sshll.u32 [#allocation4], 4
      %s119 = int_to_ptr.vmem [resolvable:$true] %s118
      %121 = dma.vmem_to_hbm [thread:$0]  %s119, 16, %s2, [#allocation5]
    $region21: #{tpu_custom_call.1} parent=1 // pred_fallthru
      _
    // Predicated region
    $region22: #{tpu_custom_call.1} parent=1 // pred_check
      _
    $region23: #{tpu_custom_call.1} parent=1 // pred_check_branch
      %123 = sbr.rel (0) target = $region25
    $region24: #{tpu_custom_call.1} parent=1 // pred_region
      %124 = dma.done [#allocation5], 16
    $region25: #{tpu_custom_call.1} parent=1 // pred_fallthru
      _
    %125 = vsyncpa [#allocation5], 1

</llo_original>
